<compile_context>
chip_gen: v7x
topology: tpu7x:2x2x1
jax: 0.10.0
libtpu: 0.0.40
codegen_flags: <defaults>
</compile_context>

<pallas_src>
import functools

import jax
import jax.numpy as jnp
from jax import lax
from jax.experimental import pallas as pl
from jax.experimental.pallas import tpu as pltpu

_MIB = 1024 * 1024


# ----------------------------------------------------------------------------
# Best-effort hardware queries (every path has a safe fallback).
# ----------------------------------------------------------------------------
def _chip_generation():
    try:
        kind = str(jax.devices()[0].device_kind)   # e.g. "TPU v5 lite", "TPU v6e"
        for ch in kind:
            if ch.isdigit():
                return int(ch)
    except Exception:
        pass
    return None


def _vmem_capacity_bytes(gen):
    try:
        cap = getattr(pltpu.get_tpu_info(), "vmem_capacity_bytes", None)
        if cap:
            return int(cap)
    except Exception:
        pass
    if gen is None or gen >= 7:
        return 64 * _MIB          # v7x (or unknown): be conservative
    return 128 * _MIB             # v5e / v6e


def _num_tensorcores(gen):
    try:
        info = pltpu.get_tpu_info()
        for attr in ("num_cores", "core_count", "num_tensorcores"):
            v = getattr(info, attr, None)
            if v:
                return int(v)
    except Exception:
        pass
    if gen in (4, 7):             # megacore generations
        return 2
    return 1


def _aligned_divisors(n, align):
    """Divisors of n that are multiples of `align`, plus n itself (descending)."""
    divs = {n}
    for d in range(align, n, align):
        if n % d == 0:
            divs.add(d)
    return sorted(divs, reverse=True)


# ----------------------------------------------------------------------------
# Main kernel: out[b, c] = mean_{h,w}( feat[b, c, h, w] * weight[0, c, h, w] )
# ----------------------------------------------------------------------------
def _mean_kernel(feat_ref, w_ref, out_ref, acc_ref, *, inv_hw, lane,
                 widen_before_mul):
    k = pl.program_id(2)

    @pl.when(k == 0)
    def _():
        acc_ref[...] = jnp.zeros_like(acc_ref)

    feat = feat_ref[...]                               # (Bt, Ct, HWt)
    w = w_ref[...]                                     # (Ct, HWt)
    if widen_before_mul:
        # f32 multiply path (always for f32 inputs; also for bf16 on v5e,
        # which has no native bf16 VPU).
        feat = feat.astype(jnp.float32)
        w = w.astype(jnp.float32)
    prod = (feat * w[None, :, :]).astype(jnp.float32)  # accumulate in f32
    bt, ct, hwt = prod.shape
    # Lane-wise partial sums only (pure VPU vreg adds): keep `lane` lanes live
    # in the accumulator, defer the single cross-lane (XLU) reduce to the
    # finalize step so the inner loop is DMA + VPU only.
    acc_ref[...] += jnp.sum(prod.reshape(bt, ct, hwt // lane, lane), axis=2)

    @pl.when(k == pl.num_programs(2) - 1)
    def _():
        out_ref[...] = (jnp.sum(acc_ref[...], axis=-1) * inv_hw).astype(out_ref.dtype)


# ----------------------------------------------------------------------------
# Loss kernel: cos_similarity(weight.view(groups, -1)), blocked over D.
# Accumulates the (G, G) Gram matrix across D blocks; normalizes at the end.
# ----------------------------------------------------------------------------
def _cos_loss_kernel(gw_ref, loss_ref, gram_ref, *, groups):
    k = pl.program_id(0)

    @pl.when(k == 0)
    def _():
        gram_ref[...] = jnp.zeros_like(gram_ref)

    gw = gw_ref[...].astype(jnp.float32)               # (G, Dt)
    gram_ref[...] += lax.dot_general(gw, gw, (((1,), (1,)), ((), ())),
                                     preferred_element_type=jnp.float32)

    @pl.when(k == pl.num_programs(0) - 1)
    def _():
        gram = gram_ref[...]
        ri = lax.broadcasted_iota(jnp.int32, gram.shape, 0)
        ci = lax.broadcasted_iota(jnp.int32, gram.shape, 1)
        is_diag = ri == ci
        diag = jnp.where(is_diag, gram, 0.0)
        nsq_col = jnp.sum(diag, axis=1, keepdims=True)   # (G, 1): ||w_i||^2
        nsq_row = jnp.sum(diag, axis=0, keepdims=True)   # (1, G): ||w_j||^2
        # cos^2_ij = gram_ij^2 / (||w_i||^2 ||w_j||^2)
        cos2 = (gram * gram) * pl.reciprocal(nsq_col * nsq_row + 1e-12)
        offdiag = jnp.where(is_diag, jnp.zeros_like(cos2), cos2)
        # Mean over all G*G entries (zeroed diagonal included) — matches torch.
        loss_ref[0, 0] = jnp.sum(offdiag) * (1.0 / float(groups * groups))


def _cos_similarity_loss(gw, *, vmem_limit_bytes):
    G, D = gw.shape
    itemsize = jnp.dtype(gw.dtype).itemsize
    budget = vmem_limit_bytes // 2
    dt = D
    for cand in _aligned_divisors(D, 128):
        if 2 * G * cand * itemsize + G * G * 4 <= budget:
            dt = cand
            break
    nd = D // dt
    loss = pl.pallas_call(
        functools.partial(_cos_loss_kernel, groups=G),
        out_shape=jax.ShapeDtypeStruct((1, 1), jnp.float32),
        grid_spec=pltpu.PrefetchScalarGridSpec(
            num_scalar_prefetch=0,
            grid=(nd,),
            in_specs=[pl.BlockSpec((G, dt), lambda k: (0, k))],
            out_specs=pl.BlockSpec((1, 1), lambda k: (0, 0)),
            scratch_shapes=[pltpu.VMEM((G, G), jnp.float32)],
        ),
        compiler_params=pltpu.CompilerParams(
            dimension_semantics=("arbitrary",),
            vmem_limit_bytes=vmem_limit_bytes,
        ),
    )(gw)
    return loss[0, 0]


# ----------------------------------------------------------------------------
# Tile selection from an explicit VMEM budget.
# ----------------------------------------------------------------------------
def _choose_tiles(B, C, HW, itemsize, budget_bytes, multicore):
    """Pick (Bt, Ct, HWt) that divide (B, C, HW), satisfy the TPU (8, 128)
    block constraints and keep the double-buffered working set under budget.

    Shrink order (per review): hwt down to a 512 lane-dense floor, then ct
    down to 128, then split the batch (bt a multiple of 8), then hwt below 512
    as a last resort."""
    bt_cands = _aligned_divisors(B, 8)       # full B or multiples of 8
    ct_cands = _aligned_divisors(C, 128)     # full C or multiples of 128
    hwt_cands = _aligned_divisors(HW, 128)   # full HW or multiples of 128

    def resident(bt, ct, hwt):
        lane = 128 if hwt % 128 == 0 else hwt
        feat_blk = bt * ct * hwt * itemsize
        w_blk = ct * hwt * itemsize
        out_blk = bt * ct * itemsize
        acc = bt * ct * lane * 4
        return 2 * (feat_blk + w_blk + out_blk) + acc   # 2x: double buffering

    bi = ci = hi = 0

    def fits():
        return resident(bt_cands[bi], ct_cands[ci], hwt_cands[hi]) <= budget_bytes

    while not fits():
        if hi + 1 < len(hwt_cands) and hwt_cands[hi + 1] >= 512:
            hi += 1                      # 1) shrink hwt toward its 512 floor
        elif ci + 1 < len(ct_cands):
            ci += 1                      # 2) shrink ct (floor is 128)
        elif bi + 1 < len(bt_cands):
            bi += 1                      # 3) split the batch
        elif hi + 1 < len(hwt_cands):
            hi += 1                      # 4) last resort: hwt below 512
        else:
            break                        # smallest legal config

    bt, ct, hwt = bt_cands[bi], ct_cands[ci], hwt_cands[hi]

    # Megacore (v7x / megacore chips): make sure at least one parallel grid
    # axis has >= 2 steps so the grid shards across both TensorCores.
    if multicore and (B // bt) == 1 and (C // ct) == 1:
        if B >= 16 and B % 2 == 0 and (B // 2) % 8 == 0:
            bt = B // 2
        elif C >= 256 and C % 2 == 0 and (C // 2) % 128 == 0:
            ct = C // 2
    return bt, ct, hwt


# ----------------------------------------------------------------------------
# Wrapper
# ----------------------------------------------------------------------------
def orthor_transform_forward(feat, weight, groups, *, tile_hw=None,
                             vmem_limit_bytes=None):
    """feat: (B, C, H, W); weight: (1, C, H, W).  Returns (out (B, C), loss)."""
    B, C, H, W = feat.shape
    assert weight.shape == (1, C, H, W)
    HW = H * W
    itemsize = jnp.dtype(feat.dtype).itemsize

    gen = _chip_generation()
    if vmem_limit_bytes is None:
        cap = _vmem_capacity_bytes(gen)
        # 3/4 of physical, capped at 96 MiB: 96 MiB on v5e/v6e (128 MiB VMEM),
        # 48 MiB on v7x (64 MiB VMEM) -> headroom for compiler scratch.
        vmem_limit_bytes = min((cap * 3) // 4, 96 * _MIB)
    budget_bytes = (3 * vmem_limit_bytes) // 4
    multicore = _num_tensorcores(gen) >= 2

    feat_r = feat.reshape(B, C, HW)      # spatial axis flattened onto lanes
    w_r = weight.reshape(C, HW)

    bt, ct, hwt = _choose_tiles(B, C, HW, itemsize, budget_bytes, multicore)
    if tile_hw is not None:
        assert HW % tile_hw == 0 and (tile_hw % 128 == 0 or tile_hw == HW)
        hwt = tile_hw
    lane = 128 if hwt % 128 == 0 else hwt
    nb, nc, nk = B // bt, C // ct, HW // hwt

    # bf16 inputs: multiply natively in bf16 on v6e/v7x (native bf16 VALU),
    # widen to f32 before the multiply on v5e / f32 inputs / unknown chips.
    widen_before_mul = not (feat.dtype == jnp.bfloat16
                            and gen is not None and gen >= 6)

    kernel = functools.partial(_mean_kernel, inv_hw=1.0 / HW, lane=lane,
                               widen_before_mul=widen_before_mul)

    cost = pl.CostEstimate(
        flops=2 * B * C * HW,
        transcendentals=0,
        bytes_accessed=(B * C * HW + C * HW) * itemsize + B * C * itemsize,
    )

    out = pl.pallas_call(
        kernel,
        out_shape=jax.ShapeDtypeStruct((B, C), feat.dtype),
        grid_spec=pltpu.PrefetchScalarGridSpec(
            num_scalar_prefetch=0,
            grid=(nb, nc, nk),           # b outermost, HW reduction innermost
            in_specs=[
                # feat tile: (Bt, Ct, HWt)
                pl.BlockSpec((bt, ct, hwt), lambda b, c, k: (b, c, k)),
                # weight tile: (Ct, HWt); index_map ignores the batch axis, so
                # it is re-fetched at most once per batch tile.
                pl.BlockSpec((ct, hwt), lambda b, c, k: (c, k)),
            ],
            out_specs=pl.BlockSpec((bt, ct), lambda b, c, k: (b, c)),
            # Lane-wise f32 accumulator (deferred cross-lane reduce).
            scratch_shapes=[pltpu.VMEM((bt, ct, lane), jnp.float32)],
        ),
        compiler_params=pltpu.CompilerParams(
            dimension_semantics=("parallel", "parallel", "arbitrary"),
            vmem_limit_bytes=vmem_limit_bytes,
        ),
        cost_estimate=cost,
    )(feat_r, w_r)

    # Tiny (groups x groups) cosine-similarity loss on the weight, computed in
    # its own D-blocked kernel (weight is never fully resident in VMEM).
    loss = _cos_similarity_loss(weight.reshape(groups, -1),
                                vmem_limit_bytes=vmem_limit_bytes)
    return out, loss


# ----------------------------------------------------------------------------
# Pure-JAX reference
# ----------------------------------------------------------------------------
def _reference(feat, weight, groups):
    pred = feat * weight                              # broadcast over batch
    out = pred.mean(-1).mean(-1)
    gw = weight.reshape(groups, -1)
    wn = gw / jnp.linalg.norm(gw, axis=-1, keepdims=True)
    cos = wn @ wn.T
    cos2 = cos ** 2
    cos2 = cos2 * (1.0 - jnp.eye(groups, dtype=cos2.dtype))
    return out, cos2.mean()


if __name__ == "__main__":
    # Small shapes consistent with the module: c_dim=4, feat_hw=16, groups=4, batch=2
    B, c_dim, feat_hw, groups = 2, 4, 16, 4

    key = jax.random.PRNGKey(0)
    k_feat, k_w = jax.random.split(key)
    feat = jax.random.normal(k_feat, (B, c_dim, feat_hw, feat_hw), dtype=jnp.float32)
    # deterministic stand-in for torch.randn(1, c_dim, feat_hw, feat_hw)
    weight = jax.random.normal(k_w, (1, c_dim, feat_hw, feat_hw), dtype=jnp.float32)

    ref_out, ref_loss = _reference(feat, weight, groups)

    # Run both the default tiling (single HW block) and a forced HW split
    # (exercises the pl.when-guarded lane-wise accumulator on the reduction axis).
    for tile_hw in (None, 128):
        out, loss = orthor_transform_forward(feat, weight, groups, tile_hw=tile_hw)
        jax.block_until_ready((out, loss))
        assert out.shape == (B, c_dim)
        assert jnp.allclose(out, ref_out, atol=1e-5, rtol=1e-5)
        assert jnp.allclose(loss, ref_loss, atol=1e-5, rtol=1e-5)

    print("KERNEL_OK")
</pallas_src>

<mosaic_0001>
module attributes {stable_mosaic.version = 11 : i64} {
  func.func @_mean_kernel(%arg0: i32, %arg1: i32, %arg2: i32, %arg3: memref<2x4x256xf32, #tpu.memory_space<vmem>>, %arg4: memref<4x256xf32, #tpu.memory_space<vmem>>, %arg5: memref<2x4xf32, #tpu.memory_space<vmem>>, %arg6: memref<2x4x128xf32, #tpu.memory_space<vmem>>) attributes {dimension_semantics = [#tpu.dimension_semantics<parallel>, #tpu.dimension_semantics<parallel>, #tpu.dimension_semantics<arbitrary>], iteration_bounds = array<i64: 1, 1, 1>, scalar_prefetch = 0 : i64, scratch_operands = 1 : i64, tpu.core_type = #tpu.core_type<tc>, window_params = [{transform_indices = @transform_0, window_bounds = array<i64: 2, 4, 256>}, {transform_indices = @transform_1, window_bounds = array<i64: 4, 256>}, {transform_indices = @transform_2, window_bounds = array<i64: 2, 4>}]} {
    %c0_i32 = arith.constant 0 : i32
    %0 = arith.cmpi eq, %arg2, %c0_i32 : i32
    %1 = arith.extui %0 : i1 to i32
    %c0_i32_0 = arith.constant 0 : i32
    %2 = arith.cmpi ne, %1, %c0_i32_0 : i32
    scf.if %2 {
      %cst_13 = arith.constant 0.000000e+00 : f32
      %16 = vector.broadcast %cst_13 : f32 to vector<2x4x128xf32>
      %c0_14 = arith.constant 0 : index
      %c0_15 = arith.constant 0 : index
      %c0_16 = arith.constant 0 : index
      %17 = vector.load %arg6[%c0_14, %c0_15, %c0_16] : memref<2x4x128xf32, #tpu.memory_space<vmem>>, vector<2x4x128xf32>
      tpu.vector_store %arg6[%c0_14, %c0_15, %c0_16], %16 {strides = array<i32>} : memref<2x4x128xf32, #tpu.memory_space<vmem>>, vector<2x4x128xf32>,
    } else {
    }
    %c0 = arith.constant 0 : index
    %c0_1 = arith.constant 0 : index
    %c0_2 = arith.constant 0 : index
    %3 = vector.load %arg3[%c0, %c0_1, %c0_2] : memref<2x4x256xf32, #tpu.memory_space<vmem>>, vector<2x4x256xf32>
    %c0_3 = arith.constant 0 : index
    %c0_4 = arith.constant 0 : index
    %4 = vector.load %arg4[%c0_3, %c0_4] : memref<4x256xf32, #tpu.memory_space<vmem>>, vector<4x256xf32>
    %5 = vector.shape_cast %4 : vector<4x256xf32> to vector<1x4x256xf32>
    %6 = vector.broadcast %5 : vector<1x4x256xf32> to vector<2x4x256xf32>
    %7 = arith.mulf %3, %6 : vector<2x4x256xf32>
    %c0_5 = arith.constant 0 : index
    %c0_6 = arith.constant 0 : index
    %c0_7 = arith.constant 0 : index
    %8 = vector.load %arg6[%c0_5, %c0_6, %c0_7] : memref<2x4x128xf32, #tpu.memory_space<vmem>>, vector<2x4x128xf32>
    %9 = vector.shape_cast %7 : vector<2x4x256xf32> to vector<2x4x2x128xf32>
    %cst = arith.constant dense<0.000000e+00> : vector<2x4x128xf32>
    %10 = vector.multi_reduction <add>, %9, %cst [2] : vector<2x4x2x128xf32> to vector<2x4x128xf32>
    %11 = arith.addf %8, %10 : vector<2x4x128xf32>
    %c0_8 = arith.constant 0 : index
    %c0_9 = arith.constant 0 : index
    %c0_10 = arith.constant 0 : index
    %12 = vector.load %arg6[%c0_8, %c0_9, %c0_10] : memref<2x4x128xf32, #tpu.memory_space<vmem>>, vector<2x4x128xf32>
    tpu.vector_store %arg6[%c0_8, %c0_9, %c0_10], %11 {strides = array<i32>} : memref<2x4x128xf32, #tpu.memory_space<vmem>>, vector<2x4x128xf32>,
    %c0_i32_11 = arith.constant 0 : i32
    %13 = arith.cmpi eq, %arg2, %c0_i32_11 : i32
    %14 = arith.extui %13 : i1 to i32
    %c0_i32_12 = arith.constant 0 : i32
    %15 = arith.cmpi ne, %14, %c0_i32_12 : i32
    scf.if %15 {
      %c0_13 = arith.constant 0 : index
      %c0_14 = arith.constant 0 : index
      %c0_15 = arith.constant 0 : index
      %16 = vector.load %arg6[%c0_13, %c0_14, %c0_15] : memref<2x4x128xf32, #tpu.memory_space<vmem>>, vector<2x4x128xf32>
      %cst_16 = arith.constant dense<0.000000e+00> : vector<2x4xf32>
      %17 = vector.multi_reduction <add>, %16, %cst_16 [2] : vector<2x4x128xf32> to vector<2x4xf32>
      %cst_17 = arith.constant 3.906250e-03 : f32
      %18 = vector.broadcast %cst_17 : f32 to vector<2x4xf32>
      %19 = arith.mulf %17, %18 : vector<2x4xf32>
      %c0_18 = arith.constant 0 : index
      %c0_19 = arith.constant 0 : index
      %20 = vector.load %arg5[%c0_18, %c0_19] : memref<2x4xf32, #tpu.memory_space<vmem>>, vector<2x4xf32>
      tpu.vector_store %arg5[%c0_18, %c0_19], %19 {strides = array<i32>} : memref<2x4xf32, #tpu.memory_space<vmem>>, vector<2x4xf32>,
    } else {
    }
    return
  }
  func.func @transform_0(%arg0: i32, %arg1: i32, %arg2: i32) -> (i32, i32, i32) {
    %c0_i32 = arith.constant 0 : i32
    return %arg0, %arg1, %arg2 : i32, i32, i32
  }
  func.func @transform_1(%arg0: i32, %arg1: i32, %arg2: i32) -> (i32, i32) {
    %c0_i32 = arith.constant 0 : i32
    return %arg1, %arg2 : i32, i32
  }
  func.func @transform_2(%arg0: i32, %arg1: i32, %arg2: i32) -> (i32, i32) {
    %c0_i32 = arith.constant 0 : i32
    return %arg0, %arg1 : i32, i32
  }
}

</mosaic_0001>

<llo_original>
// kernel: tpu_custom_call.1
$region0: #{tpu_custom_call.1}
  #allocation0 [shape = 'u32[]', space=smem, size = 0x4, offset = 0x4, fixed_abs, tag = 'smem constant byte address 0x4 - core index']
  #allocation1 [shape = 'u32[144,128]{1,0:T(1,128)}', space=vmem, size = 0x12000, scoped, tag = 'internal scratch']
  #allocation2 [shape = 'f32[2,4,128]{2,1,0:T(4,128)}', space=vmem, size = 0x1000, scoped, tag = 'scratch operand']
  %s0 = inlined_call_operand.hbm [shape: f32[2,4,256], index: 0, kind: input, shape index: {}]
  %s1 = inlined_call_operand.hbm [shape: f32[4,256], index: 1, kind: input, shape index: {}]
  %s2 = inlined_call_operand.hbm [shape: f32[2,4], index: 2, kind: output, shape index: {}]
  %s3 = sld [smem:[#allocation0]]
  $region34: #{tpu_custom_call.1} parent=0
    _
  %s5 = ssub.s32 1, %s3
  %s6 = scalar_select 0, %s5, %s3
  $region1: #{tpu_custom_call.1} parent=0
    #allocation3 [shape = 'u8[8192]{0}', space=vmem, size = 0x2000, scoped, tag = 'input window, operand 0, single buffered']
    #allocation4 [shape = 's32[1]{0}', space=sflag, size = 0x4, scoped, tag = 'scoped memory for tpu_custom_call.1']
    #allocation5 [shape = 's32[1]{0}', space=sflag, size = 0x4, scoped, tag = 'scoped memory for tpu_custom_call.1']
    #allocation6 [shape = 'u8[4096]{0}', space=vmem, size = 0x1000, scoped, tag = 'input window, operand 1, single buffered']
    #allocation7 [shape = 's32[1]{0}', space=sflag, size = 0x4, scoped, tag = 'scoped memory for tpu_custom_call.1']
    #allocation8 [shape = 'u8[1024]{0}', space=vmem, size = 0x400, scoped, tag = 'output window, operand 0, single buffered']
    %7 = vsyncpa [#allocation4], 0
    %8 = vsyncpa [#allocation7], 0
    %9 = vsyncpa [#allocation5], 0
    // Predicated region
    $region2: #{tpu_custom_call.1} parent=1 // pred_check
      _
    $region3: #{tpu_custom_call.1} parent=1 // pred_check_branch
      %11 = sbr.rel (0) target = $region5
    $region4: #{tpu_custom_call.1} parent=1 // pred_region
      %s13 = ssub.s32 256, 256
      %14 = vsyncadd [#allocation4], %s13
      %s15 = sshll.u32 [#allocation3], 4
      %s16 = int_to_ptr.vmem [resolvable:$true] %s15
      %21 = dma.hbm_to_vmem [thread:$0]  %s0, 256, %s16, [#allocation4], 128, 128, 8
    $region5: #{tpu_custom_call.1} parent=1 // pred_fallthru
      _
    // Predicated region
    $region6: #{tpu_custom_call.1} parent=1 // pred_check
      _
    $region7: #{tpu_custom_call.1} parent=1 // pred_check_branch
      %23 = sbr.rel (0) target = $region9
    $region8: #{tpu_custom_call.1} parent=1 // pred_region
      %s25 = ssub.s32 128, 128
      %26 = vsyncadd [#allocation7], %s25
      %s28 = sshll.u32 [#allocation6], 4
      %s29 = int_to_ptr.vmem [resolvable:$true] %s28
      %31 = dma.hbm_to_vmem [thread:$0]  %s1, 128, %s29, [#allocation7]
    $region9: #{tpu_custom_call.1} parent=1 // pred_fallthru
      _
    // Predicated region
    $region10: #{tpu_custom_call.1} parent=1 // pred_check
      _
    $region11: #{tpu_custom_call.1} parent=1 // pred_check_branch
      %33 = sbr.rel (0) target = $region13
    $region12: #{tpu_custom_call.1} parent=1 // pred_region
      %34 = dma.done [#allocation4], 256
    $region13: #{tpu_custom_call.1} parent=1 // pred_fallthru
      _
    // Predicated region
    $region14: #{tpu_custom_call.1} parent=1 // pred_check
      _
    $region15: #{tpu_custom_call.1} parent=1 // pred_check_branch
      %36 = sbr.rel (0) target = $region17
    $region16: #{tpu_custom_call.1} parent=1 // pred_region
      %37 = dma.done [#allocation7], 128
    $region17: #{tpu_custom_call.1} parent=1 // pred_fallthru
      _
    %p38 = scmp.eq.s32.totalorder 0, 0
    // Predicated region
    $region18: #{tpu_custom_call.1} parent=1 // pred_check
      %p39 = pneg %p38
    $region19: #{tpu_custom_call.1} parent=1 // pred_check_branch
      %41 = sbr.rel (%p39) target = $region21
    $region20: #{tpu_custom_call.1} parent=1 // pred_region
      %42 = vst [vmem:[#allocation2] sm:$0xf] 0.0
      %43 = vst [vmem:[#allocation2 + $0x4] sm:$0xf] 0.0
    $region21: #{tpu_custom_call.1} parent=1 // pred_fallthru
      _
    %v44 = vld [vmem:[#allocation3] sm:$0xff]
    %v45 = vld [vmem:[#allocation3 + $0x8] sm:$0xff]
    %v46 = vld [vmem:[#allocation6] sm:$0xff]
    %v47 = vmul.f32 %v44, %v46
    %v48 = vmul.f32 %v45, %v46
    %v49 = vld [vmem:[#allocation2] sm:$0xf]
    %v50 = vld [vmem:[#allocation2 + $0x4] sm:$0xf]
    %v53 = vrot.slane %v47, 4
    %v54 = vrot.slane %v48, 4
    %v56 = vunpack.c.l.s4 1983009808
    %v57 = vunpack.c.0.s8 %v56
    %v58 = vlaneseq
    %v59 = vshrl.u32 %v58, 7
    %v60 = vsub.s32 %v57, %v59
    %v61 = vrot.slane %v47, %v60
    %v64 = vunpack.c.l.s4 1983009808
    %v65 = vunpack.c.0.s8 %v64
    %v66 = vlaneseq
    %v67 = vshrl.u32 %v66, 7
    %v68 = vsub.s32 %v65, %v67
    %v69 = vrot.slane %v53, %v68
    %v70 = vcombine.low %v61, %v69
    %v71 = vcombine.high %v61, %v69
    %v73 = vunpack.c.l.s4 1934713408
    %v74 = vunpack.c.0.s8 %v73
    %v75 = vlaneseq
    %v76 = vshrl.u32 %v75, 7
    %v77 = vsub.s32 %v74, %v76
    %v78 = vrot.slane %v70, %v77
    %v80 = vunpack.c.l.s4 1934713408
    %v81 = vunpack.c.0.s8 %v80
    %v82 = vlaneseq
    %v83 = vshrl.u32 %v82, 7
    %v84 = vsub.s32 %v81, %v83
    %v85 = vrot.slane %v71, %v84
    %v86 = vcombine.high %v78, 0.0
    %v87 = vcombine.high %v85, 0.0
    %v89 = vunpack.c.l.s4 1983009808
    %v90 = vunpack.c.0.s8 %v89
    %v91 = vlaneseq
    %v92 = vshrl.u32 %v91, 7
    %v93 = vsub.s32 %v90, %v92
    %v94 = vrot.slane %v48, %v93
    %v97 = vunpack.c.l.s4 1983009808
    %v98 = vunpack.c.0.s8 %v97
    %v99 = vlaneseq
    %v100 = vshrl.u32 %v99, 7
    %v101 = vsub.s32 %v98, %v100
    %v102 = vrot.slane %v54, %v101
    %v103 = vcombine.low %v94, %v102
    %v104 = vcombine.high %v94, %v102
    %v106 = vunpack.c.l.s4 1934713408
    %v107 = vunpack.c.0.s8 %v106
    %v108 = vlaneseq
    %v109 = vshrl.u32 %v108, 7
    %v110 = vsub.s32 %v107, %v109
    %v111 = vrot.slane %v103, %v110
    %v113 = vunpack.c.l.s4 1934713408
    %v114 = vunpack.c.0.s8 %v113
    %v115 = vlaneseq
    %v116 = vshrl.u32 %v115, 7
    %v117 = vsub.s32 %v114, %v116
    %v118 = vrot.slane %v104, %v117
    %v119 = vcombine.high %v111, 0.0
    %v120 = vcombine.high %v118, 0.0
    %vm121 = vcmask 1041408
    %v122 = vsel %vm121, %v78, 0.0
    %v123 = vrot.slane %v122, 4
    %v124 = vadd.f32 %v122, %v123
    %v125 = vrot.slane %v124, 2
    %v126 = vadd.f32 %v124, %v125
    %v127 = vrot.slane %v126, 1
    %v128 = vadd.f32 %v126, %v127
    %v129 = vsel %vm121, %v86, 0.0
    %v130 = vrot.slane %v129, 4
    %v131 = vadd.f32 %v129, %v130
    %v132 = vrot.slane %v131, 2
    %v133 = vadd.f32 %v131, %v132
    %v134 = vrot.slane %v133, 1
    %v135 = vadd.f32 %v133, %v134
    %v136 = vsel %vm121, %v85, 0.0
    %v137 = vrot.slane %v136, 4
    %v138 = vadd.f32 %v136, %v137
    %v139 = vrot.slane %v138, 2
    %v140 = vadd.f32 %v138, %v139
    %v141 = vrot.slane %v140, 1
    %v142 = vadd.f32 %v140, %v141
    %v143 = vsel %vm121, %v87, 0.0
    %v144 = vrot.slane %v143, 4
    %v145 = vadd.f32 %v143, %v144
    %v146 = vrot.slane %v145, 2
    %v147 = vadd.f32 %v145, %v146
    %v148 = vrot.slane %v147, 1
    %v149 = vadd.f32 %v147, %v148
    %v150 = vsel %vm121, %v111, 0.0
    %v151 = vrot.slane %v150, 4
    %v152 = vadd.f32 %v150, %v151
    %v153 = vrot.slane %v152, 2
    %v154 = vadd.f32 %v152, %v153
    %v155 = vrot.slane %v154, 1
    %v156 = vadd.f32 %v154, %v155
    %v157 = vsel %vm121, %v119, 0.0
    %v158 = vrot.slane %v157, 4
    %v159 = vadd.f32 %v157, %v158
    %v160 = vrot.slane %v159, 2
    %v161 = vadd.f32 %v159, %v160
    %v162 = vrot.slane %v161, 1
    %v163 = vadd.f32 %v161, %v162
    %v164 = vsel %vm121, %v118, 0.0
    %v165 = vrot.slane %v164, 4
    %v166 = vadd.f32 %v164, %v165
    %v167 = vrot.slane %v166, 2
    %v168 = vadd.f32 %v166, %v167
    %v169 = vrot.slane %v168, 1
    %v170 = vadd.f32 %v168, %v169
    %v171 = vsel %vm121, %v120, 0.0
    %v172 = vrot.slane %v171, 4
    %v173 = vadd.f32 %v171, %v172
    %v174 = vrot.slane %v173, 2
    %v175 = vadd.f32 %v173, %v174
    %v176 = vrot.slane %v175, 1
    %v177 = vadd.f32 %v175, %v176
    %vm186 = vcmask 1041409
    %v187 = vsel %vm186, %v135, %v128
    %vm188 = vcmask 1042434
    %v189 = vsel %vm188, %v142, %v187
    %vm190 = vcmask 1043459
    %v191 = vsel %vm190, %v149, %v189
    %v192 = vsel %vm186, %v163, %v156
    %v193 = vsel %vm188, %v170, %v192
    %v194 = vsel %vm190, %v177, %v193
    %v197 = vadd.f32 %v49, %v191
    %v198 = vadd.f32 %v50, %v194
    %199 = vst [vmem:[#allocation2] sm:$0xf] %v197
    %200 = vst [vmem:[#allocation2 + $0x4] sm:$0xf] %v198
    // Predicated region
    $region22: #{tpu_custom_call.1} parent=1 // pred_check
      %p201 = pneg %p38
    $region23: #{tpu_custom_call.1} parent=1 // pred_check_branch
      %203 = sbr.rel (%p201) target = $region25
    $region24: #{tpu_custom_call.1} parent=1 // pred_region
      %v204 = vld [vmem:[#allocation2] sm:$0xf]
      %v205 = vld [vmem:[#allocation2 + $0x4] sm:$0xf]
      %vm206 = vcmask 1043456
      %v207 = vsel %vm206, %v204, 0.0
      %208 = vadd.xlane.f32.xlu0 %v207
      %v209 = vpop.xlane.xlu0 %208
      %v210 = vsel %vm206, %v205, 0.0
      %211 = vadd.xlane.f32.xlu0 %v210
      %v212 = vpop.xlane.xlu0 %211
      %v213 = vmul.f32 %v209, 0.00390625
      %v214 = vmul.f32 %v212, 0.00390625
      %v217 = vlaneseq
      %v218 = vand.u32 %v217, 127
      %v219 = vlaneseq
      %v220 = vshrl.u32 %v219, 7
      %v221 = vsub.s32 %v218, %v220
      %v222 = vrot.slane %v213, %v221
      %v223 = vlaneseq
      %v224 = vshrl.u32 %v223, 7
      %v225 = vsub.s32 %v218, %v224
      %v226 = vrot.slane %v214, %v225
      %v227 = vsel %vm186, %v226, %v222
      %vm229 = vcmask 25600
      %230 = vst.msk [vmem:[#allocation8] sm:$0x3] %vm229, %v227
    $region25: #{tpu_custom_call.1} parent=1 // pred_fallthru
      _
    // Predicated region
    $region26: #{tpu_custom_call.1} parent=1 // pred_check
      _
    $region27: #{tpu_custom_call.1} parent=1 // pred_check_branch
      %232 = sbr.rel (0) target = $region29
    $region28: #{tpu_custom_call.1} parent=1 // pred_region
      %s234 = ssub.s32 32, 32
      %235 = vsyncadd [#allocation5], %s234
      %s237 = sshll.u32 [#allocation8], 4
      %s238 = int_to_ptr.vmem [resolvable:$true] %s237
      %240 = dma.vmem_to_hbm [thread:$0]  %s238, 32, %s2, [#allocation5]
    $region29: #{tpu_custom_call.1} parent=1 // pred_fallthru
      _
    // Predicated region
    $region30: #{tpu_custom_call.1} parent=1 // pred_check
      _
    $region31: #{tpu_custom_call.1} parent=1 // pred_check_branch
      %242 = sbr.rel (0) target = $region33
    $region32: #{tpu_custom_call.1} parent=1 // pred_region
      %243 = dma.done [#allocation5], 32
    $region33: #{tpu_custom_call.1} parent=1 // pred_fallthru
      _
    %244 = vsyncpa [#allocation4], 1
    %245 = vsyncpa [#allocation7], 1
    %246 = vsyncpa [#allocation5], 1

</llo_original>
